<compile_context>
chip_gen: v6e
topology: v6e:2x2x1
jax: 0.10.0
libtpu: 0.0.40
codegen_flags: <defaults>
</compile_context>

<pallas_src>
import math
import jax
import jax.numpy as jnp
from jax.experimental import pallas as pl
from jax.experimental.pallas import tpu as pltpu


def _round_up(x, m):
    return ((x + m - 1) // m) * m


def _pick_td(d_model, td_max):
    """d_model tile: a multiple of 128 that divides d_model (lane-dense stores),
    falling back to the full d_model as a single block."""
    if d_model <= td_max:
        return d_model
    if d_model % 128 == 0:
        td = (td_max // 128) * 128
        while td >= 128:
            if d_model % td == 0:
                return td
            td -= 128
    return d_model


def _vmem_estimate(tn, td, n_pad, c_in, out_itemsize):
    idx_b = 2 * n_pad * 4                      # resident indices (counted double-buffered, conservative)
    tbl_b = 2 * c_in * td * 4                  # double-buffered table slice
    out_b = 2 * tn * td * out_itemsize         # double-buffered output tile
    tmp_b = 2 * tn * c_in * 4 + tn * td * 4    # iota + one_hot + f32 matmul accumulator
    return idx_b + tbl_b + out_b + tmp_b


def fixed_embedding_kernel(idx_ref, tbl_ref, o_ref):
    # idx_ref: (n_pad, 1) int32  -- resident, fetched once for the whole grid
    # tbl_ref: (c_in, td) f32    -- re-fetched only when the d_model tile changes
    # o_ref:   (tn, td)
    i = pl.program_id(1)                       # token-tile index (innermost grid axis)
    tn = o_ref.shape[0]
    start = pl.multiple_of(i * tn, tn)
    idx = idx_ref[pl.ds(start, tn), :]                          # (tn, 1)
    c_in = tbl_ref.shape[0]
    iota_c = jax.lax.broadcasted_iota(jnp.int32, (tn, c_in), 1)  # (tn, c_in)
    one_hot = (idx == iota_c).astype(tbl_ref.dtype)              # (tn, c_in)
    o_ref[...] = jnp.dot(
        one_hot, tbl_ref[...],
        preferred_element_type=jnp.float32,
        precision=jax.lax.Precision.HIGHEST,                     # bit-exact gather
    ).astype(o_ref.dtype)


def fixed_embedding(x, table, *, out_dtype=None, tn_max=1024, td_max=1024,
                    vmem_budget_bytes=40 * 1024 * 1024,
                    small_output_fallback_bytes=0):
    """x: integer indices of any shape (values in [0, c_in));
    table: (c_in, d_model) float32 fixed sinusoidal embedding table.
    Returns x.shape + (d_model,) in `out_dtype` (default table.dtype)."""
    orig_shape = x.shape
    c_in, d_model = table.shape
    out_dtype = table.dtype if out_dtype is None else jnp.dtype(out_dtype)
    out_itemsize = jnp.dtype(out_dtype).itemsize

    idx = x.reshape(-1).astype(jnp.int32)
    n = int(idx.shape[0])
    if n == 0:
        return jnp.zeros(orig_shape + (d_model,), out_dtype)

    # Optional XLA-gather fast path for tiny outputs where pallas_call launch /
    # pipeline overhead dominates; disabled by default (threshold 0) so the Pallas
    # path is always exercised.
    if n * d_model * out_itemsize <= small_output_fallback_bytes:
        return jnp.take(table, idx, axis=0).astype(out_dtype).reshape(*orig_shape, d_model)

    # d_model tile (lane-dense).
    td = _pick_td(d_model, td_max)

    # Token tile: pad the flattened token count up to the tile (no exact-divisor
    # perf cliff) and guarantee >= 2 token tiles when there is enough work so both
    # v7x TensorCores get a share of the "parallel" token axis.
    n8 = _round_up(n, 8)
    n_tiles_target = max(pl.cdiv(n8, tn_max), 2 if n8 > 8 else 1)
    tn = _round_up(pl.cdiv(n8, n_tiles_target), 8)
    n_pad = _round_up(n8, tn)

    # Shrink tiles until the double-buffered working set fits a VMEM budget that
    # is safe on every generation (v7x has only 64 MiB physical VMEM).
    while _vmem_estimate(tn, td, n_pad, c_in, out_itemsize) > vmem_budget_bytes:
        if tn > 8:
            tn = max(8, _round_up(tn // 2, 8))
            n_pad = _round_up(n8, tn)
        elif td % 256 == 0:
            td //= 2
        else:
            break
    # TODO(synk): for very large vocabularies (c_in >~ 2K) a scalar-prefetch DMA
    # row-gather would beat the one-hot matmul; this path targets the small fixed
    # sinusoidal table FixedEmbedding actually uses.

    if n_pad != n:
        idx = jnp.concatenate([idx, jnp.zeros((n_pad - n,), jnp.int32)])
    idx = idx.reshape(n_pad, 1)

    d_tiles = d_model // td
    n_token_tiles = n_pad // tn

    est = _vmem_estimate(tn, td, n_pad, c_in, out_itemsize)
    vmem_limit = int(min(48 * 1024 * 1024, max(32 * 1024 * 1024, est + 8 * 1024 * 1024)))

    out = pl.pallas_call(
        fixed_embedding_kernel,
        out_shape=jax.ShapeDtypeStruct((n_pad, d_model), out_dtype),
        grid=(d_tiles, n_token_tiles),   # token axis innermost -> table block revisited (DMA skipped)
        in_specs=[
            pl.BlockSpec((n_pad, 1), lambda j, i: (0, 0)),    # indices: fetched once, resident
            pl.BlockSpec((c_in, td), lambda j, i: (0, j)),    # table slice: DMA only when j changes
        ],
        out_specs=pl.BlockSpec((tn, td), lambda j, i: (i, j)),
        compiler_params=pltpu.CompilerParams(
            dimension_semantics=("parallel", "parallel"),
            vmem_limit_bytes=vmem_limit,
        ),
    )(idx, table)

    out = out[:n]
    return out.reshape(*orig_shape, d_model)


def make_fixed_embedding_table(c_in, d_model):
    """Matches the PyTorch FixedEmbedding table construction (d_model assumed even)."""
    position = jnp.arange(c_in, dtype=jnp.float32)[:, None]                       # (c_in, 1)
    div_term = jnp.exp(jnp.arange(0, d_model, 2, dtype=jnp.float32)
                       * -(math.log(10000.0) / d_model))                          # (d_model/2,)
    w = jnp.zeros((c_in, d_model), jnp.float32)
    w = w.at[:, 0::2].set(jnp.sin(position * div_term))
    w = w.at[:, 1::2].set(jnp.cos(position * div_term))
    return w


def fixed_embedding_ref(x, table):
    """Pure-JAX reference: frozen embedding lookup."""
    return jnp.take(table, x.astype(jnp.int32), axis=0)


if __name__ == "__main__":
    key = jax.random.PRNGKey(0)

    B, L = 2, 8                  # batch, sequence
    c_in, d_model = 24, 128      # vocab (e.g. hour-of-day), hidden (multiple of 128 -> lane-dense)

    table = make_fixed_embedding_table(c_in, d_model)
    x = jax.random.randint(key, (B, L), 0, c_in, dtype=jnp.int32)

    out = fixed_embedding(x, table)
    out = jax.block_until_ready(out)

    ref = fixed_embedding_ref(x, table)
    assert out.shape == (B, L, d_model), out.shape
    assert jnp.allclose(out, ref, atol=1e-6, rtol=0.0), float(jnp.max(jnp.abs(out - ref)))

    print("KERNEL_OK")
</pallas_src>

<mosaic_0001>
module attributes {stable_mosaic.version = 11 : i64} {
  func.func @fixed_embedding_kernel(%arg0: i32, %arg1: i32, %arg2: memref<16x1xi32, #tpu.memory_space<vmem>>, %arg3: memref<24x128xf32, #tpu.memory_space<vmem>>, %arg4: memref<8x128xf32, #tpu.memory_space<vmem>>) attributes {dimension_semantics = [#tpu.dimension_semantics<parallel>, #tpu.dimension_semantics<parallel>], iteration_bounds = array<i64: 1, 2>, scalar_prefetch = 0 : i64, scratch_operands = 0 : i64, tpu.core_type = #tpu.core_type<tc>, window_params = [{pipeline_mode = #tpu.pipeline_mode<synchronous>, transform_indices = @transform_0, window_bounds = array<i64: 16, 1>}, {transform_indices = @transform_1, window_bounds = array<i64: 24, 128>}, {transform_indices = @transform_2, window_bounds = array<i64: 8, 128>}]} {
    %c8_i32 = arith.constant 8 : i32
    %0 = arith.muli %arg1, %c8_i32 : i32
    %1 = tpu.assume_multiple %0, 8 : i32
    %2 = arith.index_cast %1 : i32 to index
    %c0 = arith.constant 0 : index
    %3 = vector.load %arg2[%2, %c0] : memref<16x1xi32, #tpu.memory_space<vmem>>, vector<8x1xi32>
    %4 = tpu.iota {dimensions = array<i32: 1>} : vector<8x24xi32>
    %5 = vector.broadcast %3 : vector<8x1xi32> to vector<8x24xi32>
    %6 = arith.cmpi eq, %5, %4 : vector<8x24xi32>
    %7 = arith.extui %6 : vector<8x24xi1> to vector<8x24xi32>
    %8 = arith.sitofp %7 : vector<8x24xi32> to vector<8x24xf32>
    %c0_0 = arith.constant 0 : index
    %c0_1 = arith.constant 0 : index
    %9 = vector.load %arg3[%c0_0, %c0_1] : memref<24x128xf32, #tpu.memory_space<vmem>>, vector<24x128xf32>
    %cst = arith.constant dense<0.000000e+00> : vector<8x128xf32>
    %10 = tpu.matmul %8, %9, %cst {dimension_numbers = #tpu.dot_dimension_numbers<[1], [0], [0], [1], [0, 0, 1, 1], [], []>, precision = #tpu.contract_precision<fp32>} : vector<8x24xf32>, vector<24x128xf32>, vector<8x128xf32> -> vector<8x128xf32>
    %c0_2 = arith.constant 0 : index
    %c0_3 = arith.constant 0 : index
    %11 = vector.load %arg4[%c0_2, %c0_3] : memref<8x128xf32, #tpu.memory_space<vmem>>, vector<8x128xf32>
    tpu.vector_store %arg4[%c0_2, %c0_3], %10 {strides = array<i32>} : memref<8x128xf32, #tpu.memory_space<vmem>>, vector<8x128xf32>,
    return
  }
  func.func @transform_0(%arg0: i32, %arg1: i32) -> (i32, i32) {
    %c0_i32 = arith.constant 0 : i32
    %c0_i32_0 = arith.constant 0 : i32
    %c0_i32_1 = arith.constant 0 : i32
    return %c0_i32, %c0_i32_0 : i32, i32
  }
  func.func @transform_1(%arg0: i32, %arg1: i32) -> (i32, i32) {
    %c0_i32 = arith.constant 0 : i32
    %c0_i32_0 = arith.constant 0 : i32
    return %c0_i32, %arg0 : i32, i32
  }
  func.func @transform_2(%arg0: i32, %arg1: i32) -> (i32, i32) {
    %c0_i32 = arith.constant 0 : i32
    return %arg1, %arg0 : i32, i32
  }
}

</mosaic_0001>

<llo_original>
// kernel: tpu_custom_call.1
$region0: #{tpu_custom_call.1}
  #allocation0 [shape = 'u32[]', space=smem, size = 0x4, offset = 0x4, fixed_abs, tag = 'smem constant byte address 0x4 - core index']
  #allocation1 [shape = 'u32[144,128]{1,0:T(1,128)}', space=vmem, size = 0x12000, scoped, tag = 'internal scratch']
  %s0 = inlined_call_operand.vmem [shape: s32[16,1], index: 0, kind: input, shape index: {}]
  %s1 = inlined_call_operand.hbm [shape: f32[24,128], index: 1, kind: input, shape index: {}]
  %s2 = inlined_call_operand.hbm [shape: f32[16,128], index: 2, kind: output, shape index: {}]
  %s3 = sld [smem:[#allocation0]]
  $region45: #{tpu_custom_call.1} parent=0
    _
  %s5 = ssub.s32 1, %s3
  %s6 = scalar_select 0, %s5, %s3
  $region1: #{tpu_custom_call.1} parent=0
    #allocation2 [shape = 'u8[12288]{0}', space=vmem, size = 0x3000, scoped, tag = 'input window, operand 1, single buffered']
    #allocation3 [shape = 's32[2]{0}', space=sflag, size = 0x8, scoped, tag = 'scoped memory for tpu_custom_call.1']
    #allocation4 [shape = 's32[2]{0}', space=sflag, size = 0x8, scoped, tag = 'scoped memory for tpu_custom_call.1']
    #allocation5 [shape = 'u8[8192]{0}', space=vmem, size = 0x2000, scoped, tag = 'output window, operand 0']
    %7 = vsyncpa [#allocation3], 0
    %8 = vsyncpa [#allocation4], 0
    %s9 = scalar_lea.sflag [#allocation4], 1
    %10 = vsyncpa %s9, 0
    loop: start=0, step=1, limit=4
    $region2: #{tpu_custom_call.1} parent=1 // loop_pre_header
      _
    $region3: #{tpu_custom_call.1} parent=1 // loop_header
      %s12 = sphi 0, %s16
      %p13 = scmp.ge.s32.totalorder %s12, 4
      %s19 = sphi 0, %s31
      %s20 = sphi 0, %s27
      %s21 = sphi 0, %s19
      %s22 = sphi 0, %s20
      %s23 = sphi 0, %s21
      %s24 = sphi 0, %s22
      %s32 = sphi 0, %s32
      %s34 = sphi 0, %s32
      %s35 = sphi 0, %s34
      %s49 = sphi 0, %s35
      %s55 = sphi 0, %s57
      %s58 = sphi 0, %s55
      %s59 = sphi 0, %s58
      %s75 = sphi 0, %s59
      %s83 = sphi 0, %s85
      %s86 = sphi 0, %s83
      %s87 = sphi 0, %s86
      %s103 = sphi 0, %s87
    $region4: #{tpu_custom_call.1} parent=1 // loop_header_branch
      %15 = sbr.rel (%p13) target = $region8
    $region5: #{tpu_custom_call.1} parent=1 // loop_body
      %s17 = ssub.s32 %s12, 1
      %s18 = ssub.s32 %s12, 2
      %s25 = sadd.s32 1, %s20
      %p26 = scmp.ge.s32.totalorder %s25, 2
      %s27 = scalar_select %p26, 0, %s25
      %s28 = sadd.s32 1, %s19
      %s29 = scalar_select %p26, %s28, %s19
      %p30 = scmp.ge.s32.totalorder %s29, 1
      %s31 = scalar_select %p30, 0, %s29
      %s33 = sadd.s32 %s32, 1
      %p36 = scmp.eq.s32.totalorder %s12, 1
      %p37 = scmp.ne.s32.totalorder %s32, %s34
      %p38 = scmp.eq.s32.totalorder %s12, 0
      %p39 = por %p37, %p38
      %p40 = scmp.ne.s32.totalorder %s32, %s34
      %p41 = scmp.eq.s32.totalorder %s17, 1
      %p42 = por %p40, %p41
      %p43 = scmp.ne.s32.totalorder %s34, %s35
      %p44 = scmp.eq.s32.totalorder %s17, 0
      %p45 = por %p43, %p44
      %p46 = scmp.ne.s32.totalorder %s34, %s35
      %p47 = scmp.eq.s32.totalorder %s18, 1
      %p48 = por %p46, %p47
      %p50 = scmp.ne.s32.totalorder %s35, %s49
      %p51 = scmp.eq.s32.totalorder %s18, 0
      %p52 = por %p50, %p51
      %s53 = ssub.s32 %s19, %s31
      %p54 = scmp.eq.s32.totalorder %s53, 0
      %s56 = sadd.s32 %s55, 1
      %s57 = scalar_select %p54, %s55, %s56
      %p60 = pneg %p54
      %p61 = scmp.eq.s32.totalorder %s12, 1
      %p62 = por %p60, %p61
      %p63 = scmp.ne.s32.totalorder %s55, %s58
      %p64 = scmp.eq.s32.totalorder %s12, 0
      %p65 = por %p63, %p64
      %p66 = scmp.ne.s32.totalorder %s55, %s58
      %p67 = scmp.eq.s32.totalorder %s17, 1
      %p68 = por %p66, %p67
      %p69 = scmp.ne.s32.totalorder %s58, %s59
      %p70 = scmp.eq.s32.totalorder %s17, 0
      %p71 = por %p69, %p70
      %p72 = scmp.ne.s32.totalorder %s58, %s59
      %p73 = scmp.eq.s32.totalorder %s18, 1
      %p74 = por %p72, %p73
      %p76 = scmp.ne.s32.totalorder %s59, %s75
      %p77 = scmp.eq.s32.totalorder %s18, 0
      %p78 = por %p76, %p77
      %s79 = ssub.s32 %s20, %s27
      %s80 = ssub.s32 %s19, %s31
      %s81 = sor.u32 %s79, %s80
      %p82 = scmp.eq.s32.totalorder %s81, 0
      %s84 = sadd.s32 %s83, 1
      %s85 = scalar_select %p82, %s83, %s84
      %p88 = pneg %p82
      %p89 = scmp.eq.s32.totalorder %s12, 1
      %p90 = por %p88, %p89
      %p91 = scmp.ne.s32.totalorder %s83, %s86
      %p92 = scmp.eq.s32.totalorder %s12, 0
      %p93 = por %p91, %p92
      %p94 = scmp.ne.s32.totalorder %s83, %s86
      %p95 = scmp.eq.s32.totalorder %s17, 1
      %p96 = por %p94, %p95
      %p97 = scmp.ne.s32.totalorder %s86, %s87
      %p98 = scmp.eq.s32.totalorder %s17, 0
      %p99 = por %p97, %p98
      %p100 = scmp.ne.s32.totalorder %s86, %s87
      %p101 = scmp.eq.s32.totalorder %s18, 1
      %p102 = por %p100, %p101
      %p104 = scmp.ne.s32.totalorder %s87, %s103
      %p105 = scmp.eq.s32.totalorder %s18, 0
      %p106 = por %p104, %p105
      %p107 = scmp.le.s32.totalorder 1, %s12
      %p108 = scmp.lt.s32.totalorder %s12, 3
      %p109 = pnand %p107, %p108
      %p110 = pneg %p109
      // Predicated region
      $region9: #{tpu_custom_call.1} parent=5 // pred_check
        _
      $region10: #{tpu_custom_call.1} parent=5 // pred_check_branch
        %112 = sbr.rel (%p109) target = $region12
      $region11: #{tpu_custom_call.1} parent=5 // pred_region
        %s113 = ssub.s32 %s12, 1
        // Predicated region
        $region13: #{tpu_custom_call.1} parent=11 // pred_check
          %p114 = pneg %p45
        $region14: #{tpu_custom_call.1} parent=11 // pred_check_branch
          %116 = sbr.rel (%p114) target = $region16
        $region15: #{tpu_custom_call.1} parent=11 // pred_region
          _
        $region16: #{tpu_custom_call.1} parent=11 // pred_fallthru
          _
        // Predicated region
        $region17: #{tpu_custom_call.1} parent=11 // pred_check
          %p117 = pneg %p71
        $region18: #{tpu_custom_call.1} parent=11 // pred_check_branch
          %119 = sbr.rel (%p117) target = $region20
        $region19: #{tpu_custom_call.1} parent=11 // pred_region
          %s121 = ssub.s32 384, 384
          %122 = vsyncadd [#allocation3], %s121
          %s123 = smul.addr %s21, 128
          %s124 = scalar_lea.hbm %s1, %s123
          %s125 = sshll.u32 [#allocation2], 4
          %s126 = int_to_ptr.vmem [resolvable:$true] %s125
          %131 = dma.hbm_to_vmem [thread:$0]  %s124, 384, %s126, [#allocation3], 128, 128, 8
        $region20: #{tpu_custom_call.1} parent=11 // pred_fallthru
          _
      $region12: #{tpu_custom_call.1} parent=5 // pred_fallthru
        _
      %p132 = scmp.lt.s32.totalorder %s12, 2
      // Predicated region
      $region21: #{tpu_custom_call.1} parent=5 // pred_check
        %p133 = pneg %p132
      $region22: #{tpu_custom_call.1} parent=5 // pred_check_branch
        %135 = sbr.rel (%p133) target = $region24
      $region23: #{tpu_custom_call.1} parent=5 // pred_region
        _
      $region24: #{tpu_custom_call.1} parent=5 // pred_fallthru
        _
      %p136 = scmp.le.s32.totalorder 1, %s12
      %p137 = scmp.lt.s32.totalorder %s12, 3
      %p138 = pnand %p136, %p137
      %p139 = pneg %p138
      // Predicated region
      $region25: #{tpu_custom_call.1} parent=5 // pred_check
        _
      $region26: #{tpu_custom_call.1} parent=5 // pred_check_branch
        %141 = sbr.rel (%p138) target = $region28
      $region27: #{tpu_custom_call.1} parent=5 // pred_region
        %s142 = ssub.s32 %s12, 1
        // Predicated region
        $region29: #{tpu_custom_call.1} parent=27 // pred_check
          %p143 = pneg %p71
        $region30: #{tpu_custom_call.1} parent=27 // pred_check_branch
          %145 = sbr.rel (%p143) target = $region32
        $region31: #{tpu_custom_call.1} parent=27 // pred_region
          %146 = dma.done [#allocation3], 384
        $region32: #{tpu_custom_call.1} parent=27 // pred_fallthru
          _
        %p147 = pneg %p45
        %p148 = pneg %p42
        %p149 = pneg %p71
        %p150 = pneg %p68
        %p151 = pneg %p99
        %p152 = pneg %p96
        %s153 = sand.u32 %s86, 1
        %s154 = scalar_lea.sflag [#allocation4], %s153
        %s155 = sand.u32 %s86, 1
        %s156 = smul.addr %s155, 8
        %s157 = scalar_lea.vmem [#allocation5], %s156
        %s158 = smul.u32 %s22, 8
        %s159 = scalar_lea.vmem %s0, %s158
        %v160 = vld [vmem:[%s159] sm:$0xff]
        %v161 = vlaneseq
        %v162 = vand.u32 %v161, 127
        %163 = vset.pattern.permute.xlu0 0
        %164 = vperm.xlu0 %163, %v160
        %v165 = vpop.permute.xlu0 %164
        %vm166 = vcmp.eq.s32.totalorder %v165, %v162
        %v167 = vsel %vm166, 1, 0
        %v168 = vcvt.s32.f32 %v167
        %v169 = vld [vmem:[#allocation2] sm:$0xff]
        %v170 = vld [vmem:[#allocation2 + $0x8] sm:$0xff]
        %v171 = vld [vmem:[#allocation2 + $0x10] sm:$0xff]
        %vm172 = vcmask 195584
        %v174 = vsel %vm172, %v168, 0
        %176 = vmatprep.subr.mxu0 0.0
        %177 = vmatpush1.msra.mxu0 0.0
        %178 = vmatprep.subr.mxu0 0.0
        %179 = vmatpush1.msra.mxu0 0.0
        %180 = vmatprep.subr.mxu0 0.0
        %181 = vmatpush1.msra.mxu0 0.0
        %182 = vmatprep.subr.mxu0 0.0
        %183 = vmatpush1.msra.mxu0 0.0
        %184 = vmatprep.subr.mxu0 0.0
        %185 = vmatpush1.msra.mxu0 0.0
        %186 = vmatprep.subr.mxu0 0.0
        %187 = vmatpush1.msra.mxu0 0.0
        %188 = vmatprep.subr.mxu0 0.0
        %189 = vmatpush1.msra.mxu0 0.0
        %190 = vmatprep.subr.mxu0 0.0
        %191 = vmatpush1.msra.mxu0 0.0
        %192 = vmatprep.subr.mxu0 0.0
        %193 = vmatpush1.msra.mxu0 0.0
        %194 = vmatprep.subr.mxu0 0.0
        %195 = vmatpush1.msra.mxu0 0.0
        %196 = vmatprep.subr.mxu0 0.0
        %197 = vmatpush1.msra.mxu0 0.0
        %198 = vmatprep.subr.mxu0 0.0
        %199 = vmatpush1.msra.mxu0 0.0
        %200 = vmatprep.subr.mxu0 0.0
        %201 = vmatpush1.msra.mxu0 0.0
        %202 = vmatprep.subr.mxu0 0.0
        %v203 = vand.u32 %v171, 4294901760
        %204 = vmatpush1.msra.mxu0 %v203
        %205 = vmatprep.subr.mxu0 0.0
        %v206 = vand.u32 %v170, 4294901760
        %207 = vmatpush1.msra.mxu0 %v206
        %208 = vmatprep.subr.mxu0 0.0
        %v209 = vand.u32 %v169, 4294901760
        %210 = vmatpush1.msra.mxu0 %v209
        %211 = vmatprep.subr.mxu0 0.0
        %212 = vmatpush2.msra.mxu0 0.0
        %213 = vmatprep.subr.mxu0 0.0
        %214 = vmatpush2.msra.mxu0 0.0
        %215 = vmatprep.subr.mxu0 0.0
        %216 = vmatpush2.msra.mxu0 0.0
        %217 = vmatprep.subr.mxu0 0.0
        %218 = vmatpush2.msra.mxu0 0.0
        %219 = vmatprep.subr.mxu0 0.0
        %220 = vmatpush2.msra.mxu0 0.0
        %221 = vmatprep.subr.mxu0 0.0
        %222 = vmatpush2.msra.mxu0 0.0
        %223 = vmatprep.subr.mxu0 0.0
        %224 = vmatpush2.msra.mxu0 0.0
        %225 = vmatprep.subr.mxu0 0.0
        %226 = vmatpush2.msra.mxu0 0.0
        %227 = vmatprep.subr.mxu0 0.0
        %228 = vmatpush2.msra.mxu0 0.0
        %229 = vmatprep.subr.mxu0 0.0
        %230 = vmatpush2.msra.mxu0 0.0
        %231 = vmatprep.subr.mxu0 0.0
        %232 = vmatpush2.msra.mxu0 0.0
        %233 = vmatprep.subr.mxu0 0.0
        %234 = vmatpush2.msra.mxu0 0.0
        %235 = vmatprep.subr.mxu0 0.0
        %236 = vmatpush2.msra.mxu0 0.0
        %237 = vmatprep.subr.mxu0 0.0
        %238 = vmatpush2.msra.mxu0 0.0
        %239 = vmatprep.subr.mxu0 0.0
        %240 = vmatpush2.msra.mxu0 0.0
        %241 = vmatprep.subr.mxu0 0.0
        %242 = vmatpush2.msra.mxu0 0.0
        %243 = vmatprep.mubr.f32.mxu0 0.0
        %v244 = vand.u32 %v174, 4294901760
        %v245 = vsub.f32 %v174, %v244
        %v246 = vand.u32 %v245, 4294901760
        %v247 = vsub.f32 %v245, %v246
        %v248 = vand.u32 %v247, 4294901760
        %249 = vmatmul.mubr.f32.gmra.mxu0 %v248
        %v250 = vpop.f32.mrf.mxu0
        %v251 = vadd.f32 0.0, %v250
        %v252 = vpop.f32.mrf.mxu0
        %253 = vdwg.mxu0
        %254 = vmatprep.subr.mxu0 0.0
        %255 = vmatpush1.msra.mxu0 0.0
        %256 = vmatprep.subr.mxu0 0.0
        %257 = vmatpush1.msra.mxu0 0.0
        %258 = vmatprep.subr.mxu0 0.0
        %259 = vmatpush1.msra.mxu0 0.0
        %260 = vmatprep.subr.mxu0 0.0
        %261 = vmatpush1.msra.mxu0 0.0
        %262 = vmatprep.subr.mxu0 0.0
        %263 = vmatpush1.msra.mxu0 0.0
        %264 = vmatprep.subr.mxu0 0.0
        %265 = vmatpush1.msra.mxu0 0.0
        %266 = vmatprep.subr.mxu0 0.0
        %267 = vmatpush1.msra.mxu0 0.0
        %268 = vmatprep.subr.mxu0 0.0
        %269 = vmatpush1.msra.mxu0 0.0
        %270 = vmatprep.subr.mxu0 0.0
        %271 = vmatpush1.msra.mxu0 0.0
        %272 = vmatprep.subr.mxu0 0.0
        %273 = vmatpush1.msra.mxu0 0.0
        %274 = vmatprep.subr.mxu0 0.0
        %275 = vmatpush1.msra.mxu0 0.0
        %276 = vmatprep.subr.mxu0 0.0
        %277 = vmatpush1.msra.mxu0 0.0
        %278 = vmatprep.subr.mxu0 0.0
        %279 = vmatpush1.msra.mxu0 0.0
        %280 = vmatprep.subr.mxu0 0.0
        %v281 = vand.u32 %v171, 4294901760
        %v282 = vsub.f32 %v171, %v281
        %v283 = vand.u32 %v282, 4294901760
        %v284 = vsub.f32 %v282, %v283
        %v285 = vand.u32 %v284, 4294901760
        %286 = vmatpush1.msra.mxu0 %v285
        %287 = vmatprep.subr.mxu0 0.0
        %v288 = vand.u32 %v170, 4294901760
        %v289 = vsub.f32 %v170, %v288
        %v290 = vand.u32 %v289, 4294901760
        %v291 = vsub.f32 %v289, %v290
        %v292 = vand.u32 %v291, 4294901760
        %293 = vmatpush1.msra.mxu0 %v292
        %294 = vmatprep.subr.mxu0 0.0
        %v295 = vand.u32 %v169, 4294901760
        %v296 = vsub.f32 %v169, %v295
        %v297 = vand.u32 %v296, 4294901760
        %v298 = vsub.f32 %v296, %v297
        %v299 = vand.u32 %v298, 4294901760
        %300 = vmatpush1.msra.mxu0 %v299
        %301 = vmatprep.subr.mxu0 0.0
        %302 = vmatpush2.msra.mxu0 0.0
        %303 = vmatprep.subr.mxu0 0.0
        %304 = vmatpush2.msra.mxu0 0.0
        %305 = vmatprep.subr.mxu0 0.0
        %306 = vmatpush2.msra.mxu0 0.0
        %307 = vmatprep.subr.mxu0 0.0
        %308 = vmatpush2.msra.mxu0 0.0
        %309 = vmatprep.subr.mxu0 0.0
        %310 = vmatpush2.msra.mxu0 0.0
        %311 = vmatprep.subr.mxu0 0.0
        %312 = vmatpush2.msra.mxu0 0.0
        %313 = vmatprep.subr.mxu0 0.0
        %314 = vmatpush2.msra.mxu0 0.0
        %315 = vmatprep.subr.mxu0 0.0
        %316 = vmatpush2.msra.mxu0 0.0
        %317 = vmatprep.subr.mxu0 0.0
        %318 = vmatpush2.msra.mxu0 0.0
        %319 = vmatprep.subr.mxu0 0.0
        %320 = vmatpush2.msra.mxu0 0.0
        %321 = vmatprep.subr.mxu0 0.0
        %322 = vmatpush2.msra.mxu0 0.0
        %323 = vmatprep.subr.mxu0 0.0
        %324 = vmatpush2.msra.mxu0 0.0
        %325 = vmatprep.subr.mxu0 0.0
        %326 = vmatpush2.msra.mxu0 0.0
        %327 = vmatprep.subr.mxu0 0.0
        %328 = vmatpush2.msra.mxu0 0.0
        %329 = vmatprep.subr.mxu0 0.0
        %330 = vmatpush2.msra.mxu0 0.0
        %331 = vmatprep.subr.mxu0 0.0
        %332 = vmatpush2.msra.mxu0 0.0
        %333 = vmatprep.mubr.f32.mxu0 0.0
        %v334 = vand.u32 %v174, 4294901760
        %335 = vmatmul.mubr.f32.gmra.mxu0 %v334
        %v336 = vpop.f32.mrf.mxu0
        %v337 = vadd.f32 %v251, %v336
        %v338 = vpop.f32.mrf.mxu0
        %339 = vdwg.mxu0
        %340 = vmatprep.subr.mxu0 0.0
        %341 = vmatpush1.msra.mxu0 0.0
        %342 = vmatprep.subr.mxu0 0.0
        %343 = vmatpush1.msra.mxu0 0.0
        %344 = vmatprep.subr.mxu0 0.0
        %345 = vmatpush1.msra.mxu0 0.0
        %346 = vmatprep.subr.mxu0 0.0
        %347 = vmatpush1.msra.mxu0 0.0
        %348 = vmatprep.subr.mxu0 0.0
        %349 = vmatpush1.msra.mxu0 0.0
        %350 = vmatprep.subr.mxu0 0.0
        %351 = vmatpush1.msra.mxu0 0.0
        %352 = vmatprep.subr.mxu0 0.0
        %353 = vmatpush1.msra.mxu0 0.0
        %354 = vmatprep.subr.mxu0 0.0
        %355 = vmatpush1.msra.mxu0 0.0
        %356 = vmatprep.subr.mxu0 0.0
        %357 = vmatpush1.msra.mxu0 0.0
        %358 = vmatprep.subr.mxu0 0.0
        %359 = vmatpush1.msra.mxu0 0.0
        %360 = vmatprep.subr.mxu0 0.0
        %361 = vmatpush1.msra.mxu0 0.0
        %362 = vmatprep.subr.mxu0 0.0
        %363 = vmatpush1.msra.mxu0 0.0
        %364 = vmatprep.subr.mxu0 0.0
        %365 = vmatpush1.msra.mxu0 0.0
        %366 = vmatprep.subr.mxu0 0.0
        %v367 = vand.u32 %v171, 4294901760
        %v368 = vsub.f32 %v171, %v367
        %369 = vmatpush1.msra.mxu0 %v368
        %370 = vmatprep.subr.mxu0 0.0
        %v371 = vand.u32 %v170, 4294901760
        %v372 = vsub.f32 %v170, %v371
        %373 = vmatpush1.msra.mxu0 %v372
        %374 = vmatprep.subr.mxu0 0.0
        %v375 = vand.u32 %v169, 4294901760
        %v376 = vsub.f32 %v169, %v375
        %377 = vmatpush1.msra.mxu0 %v376
        %378 = vmatprep.subr.mxu0 0.0
        %379 = vmatpush2.msra.mxu0 0.0
        %380 = vmatprep.subr.mxu0 0.0
        %381 = vmatpush2.msra.mxu0 0.0
        %382 = vmatprep.subr.mxu0 0.0
        %383 = vmatpush2.msra.mxu0 0.0
        %384 = vmatprep.subr.mxu0 0.0
        %385 = vmatpush2.msra.mxu0 0.0
        %386 = vmatprep.subr.mxu0 0.0
        %387 = vmatpush2.msra.mxu0 0.0
        %388 = vmatprep.subr.mxu0 0.0
        %389 = vmatpush2.msra.mxu0 0.0
        %390 = vmatprep.subr.mxu0 0.0
        %391 = vmatpush2.msra.mxu0 0.0
        %392 = vmatprep.subr.mxu0 0.0
        %393 = vmatpush2.msra.mxu0 0.0
        %394 = vmatprep.subr.mxu0 0.0
        %395 = vmatpush2.msra.mxu0 0.0
        %396 = vmatprep.subr.mxu0 0.0
        %397 = vmatpush2.msra.mxu0 0.0
        %398 = vmatprep.subr.mxu0 0.0
        %399 = vmatpush2.msra.mxu0 0.0
        %400 = vmatprep.subr.mxu0 0.0
        %401 = vmatpush2.msra.mxu0 0.0
        %402 = vmatprep.subr.mxu0 0.0
        %403 = vmatpush2.msra.mxu0 0.0
        %404 = vmatprep.subr.mxu0 0.0
        %405 = vmatpush2.msra.mxu0 0.0
        %406 = vmatprep.subr.mxu0 0.0
        %407 = vmatpush2.msra.mxu0 0.0
        %408 = vmatprep.subr.mxu0 0.0
        %409 = vmatpush2.msra.mxu0 0.0
        %410 = vmatprep.mubr.f32.mxu0 0.0
        %v411 = vand.u32 %v174, 4294901760
        %v412 = vsub.f32 %v174, %v411
        %413 = vmatmul.mubr.f32.gmra.mxu0 %v412
        %v414 = vpop.f32.mrf.mxu0
        %v415 = vadd.f32 %v337, %v414
        %v416 = vpop.f32.mrf.mxu0
        %417 = vdwg.mxu0
        %418 = vmatprep.subr.mxu0 0.0
        %419 = vmatpush1.msra.mxu0 0.0
        %420 = vmatprep.subr.mxu0 0.0
        %421 = vmatpush1.msra.mxu0 0.0
        %422 = vmatprep.subr.mxu0 0.0
        %423 = vmatpush1.msra.mxu0 0.0
        %424 = vmatprep.subr.mxu0 0.0
        %425 = vmatpush1.msra.mxu0 0.0
        %426 = vmatprep.subr.mxu0 0.0
        %427 = vmatpush1.msra.mxu0 0.0
        %428 = vmatprep.subr.mxu0 0.0
        %429 = vmatpush1.msra.mxu0 0.0
        %430 = vmatprep.subr.mxu0 0.0
        %431 = vmatpush1.msra.mxu0 0.0
        %432 = vmatprep.subr.mxu0 0.0
        %433 = vmatpush1.msra.mxu0 0.0
        %434 = vmatprep.subr.mxu0 0.0
        %435 = vmatpush1.msra.mxu0 0.0
        %436 = vmatprep.subr.mxu0 0.0
        %437 = vmatpush1.msra.mxu0 0.0
        %438 = vmatprep.subr.mxu0 0.0
        %439 = vmatpush1.msra.mxu0 0.0
        %440 = vmatprep.subr.mxu0 0.0
        %441 = vmatpush1.msra.mxu0 0.0
        %442 = vmatprep.subr.mxu0 0.0
        %443 = vmatpush1.msra.mxu0 0.0
        %444 = vmatprep.subr.mxu0 0.0
        %v445 = vand.u32 %v171, 4294901760
        %446 = vmatpush1.msra.mxu0 %v445
        %447 = vmatprep.subr.mxu0 0.0
        %v448 = vand.u32 %v170, 4294901760
        %449 = vmatpush1.msra.mxu0 %v448
        %450 = vmatprep.subr.mxu0 0.0
        %v451 = vand.u32 %v169, 4294901760
        %452 = vmatpush1.msra.mxu0 %v451
        %453 = vmatprep.subr.mxu0 0.0
        %454 = vmatpush2.msra.mxu0 0.0
        %455 = vmatprep.subr.mxu0 0.0
        %456 = vmatpush2.msra.mxu0 0.0
        %457 = vmatprep.subr.mxu0 0.0
        %458 = vmatpush2.msra.mxu0 0.0
        %459 = vmatprep.subr.mxu0 0.0
        %460 = vmatpush2.msra.mxu0 0.0
        %461 = vmatprep.subr.mxu0 0.0
        %462 = vmatpush2.msra.mxu0 0.0
        %463 = vmatprep.subr.mxu0 0.0
        %464 = vmatpush2.msra.mxu0 0.0
        %465 = vmatprep.subr.mxu0 0.0
        %466 = vmatpush2.msra.mxu0 0.0
        %467 = vmatprep.subr.mxu0 0.0
        %468 = vmatpush2.msra.mxu0 0.0
        %469 = vmatprep.subr.mxu0 0.0
        %470 = vmatpush2.msra.mxu0 0.0
        %471 = vmatprep.subr.mxu0 0.0
        %472 = vmatpush2.msra.mxu0 0.0
        %473 = vmatprep.subr.mxu0 0.0
        %474 = vmatpush2.msra.mxu0 0.0
        %475 = vmatprep.subr.mxu0 0.0
        %476 = vmatpush2.msra.mxu0 0.0
        %477 = vmatprep.subr.mxu0 0.0
        %478 = vmatpush2.msra.mxu0 0.0
        %479 = vmatprep.subr.mxu0 0.0
        %480 = vmatpush2.msra.mxu0 0.0
        %481 = vmatprep.subr.mxu0 0.0
        %482 = vmatpush2.msra.mxu0 0.0
        %483 = vmatprep.subr.mxu0 0.0
        %484 = vmatpush2.msra.mxu0 0.0
        %485 = vmatprep.mubr.f32.mxu0 0.0
        %v486 = vand.u32 %v174, 4294901760
        %v487 = vsub.f32 %v174, %v486
        %v488 = vand.u32 %v487, 4294901760
        %489 = vmatmul.mubr.f32.gmra.mxu0 %v488
        %v490 = vpop.f32.mrf.mxu0
        %v491 = vadd.f32 %v415, %v490
        %v492 = vpop.f32.mrf.mxu0
        %493 = vdwg.mxu0
        %494 = vmatprep.subr.mxu0 0.0
        %495 = vmatpush1.msra.mxu0 0.0
        %496 = vmatprep.subr.mxu0 0.0
        %497 = vmatpush1.msra.mxu0 0.0
        %498 = vmatprep.subr.mxu0 0.0
        %499 = vmatpush1.msra.mxu0 0.0
        %500 = vmatprep.subr.mxu0 0.0
        %501 = vmatpush1.msra.mxu0 0.0
        %502 = vmatprep.subr.mxu0 0.0
        %503 = vmatpush1.msra.mxu0 0.0
        %504 = vmatprep.subr.mxu0 0.0
        %505 = vmatpush1.msra.mxu0 0.0
        %506 = vmatprep.subr.mxu0 0.0
        %507 = vmatpush1.msra.mxu0 0.0
        %508 = vmatprep.subr.mxu0 0.0
        %509 = vmatpush1.msra.mxu0 0.0
        %510 = vmatprep.subr.mxu0 0.0
        %511 = vmatpush1.msra.mxu0 0.0
        %512 = vmatprep.subr.mxu0 0.0
        %513 = vmatpush1.msra.mxu0 0.0
        %514 = vmatprep.subr.mxu0 0.0
        %515 = vmatpush1.msra.mxu0 0.0
        %516 = vmatprep.subr.mxu0 0.0
        %517 = vmatpush1.msra.mxu0 0.0
        %518 = vmatprep.subr.mxu0 0.0
        %519 = vmatpush1.msra.mxu0 0.0
        %520 = vmatprep.subr.mxu0 0.0
        %v521 = vand.u32 %v171, 4294901760
        %v522 = vsub.f32 %v171, %v521
        %v523 = vand.u32 %v522, 4294901760
        %524 = vmatpush1.msra.mxu0 %v523
        %525 = vmatprep.subr.mxu0 0.0
        %v526 = vand.u32 %v170, 4294901760
        %v527 = vsub.f32 %v170, %v526
        %v528 = vand.u32 %v527, 4294901760
        %529 = vmatpush1.msra.mxu0 %v528
        %530 = vmatprep.subr.mxu0 0.0
        %v531 = vand.u32 %v169, 4294901760
        %v532 = vsub.f32 %v169, %v531
        %v533 = vand.u32 %v532, 4294901760
        %534 = vmatpush1.msra.mxu0 %v533
        %535 = vmatprep.subr.mxu0 0.0
        %536 = vmatpush2.msra.mxu0 0.0
        %537 = vmatprep.subr.mxu0 0.0
        %538 = vmatpush2.msra.mxu0 0.0
        %539 = vmatprep.subr.mxu0 0.0
        %540 = vmatpush2.msra.mxu0 0.0
        %541 = vmatprep.subr.mxu0 0.0
        %542 = vmatpush2.msra.mxu0 0.0
        %543 = vmatprep.subr.mxu0 0.0
        %544 = vmatpush2.msra.mxu0 0.0
        %545 = vmatprep.subr.mxu0 0.0
        %546 = vmatpush2.msra.mxu0 0.0
        %547 = vmatprep.subr.mxu0 0.0
        %548 = vmatpush2.msra.mxu0 0.0
        %549 = vmatprep.subr.mxu0 0.0
        %550 = vmatpush2.msra.mxu0 0.0
        %551 = vmatprep.subr.mxu0 0.0
        %552 = vmatpush2.msra.mxu0 0.0
        %553 = vmatprep.subr.mxu0 0.0
        %554 = vmatpush2.msra.mxu0 0.0
        %555 = vmatprep.subr.mxu0 0.0
        %556 = vmatpush2.msra.mxu0 0.0
        %557 = vmatprep.subr.mxu0 0.0
        %558 = vmatpush2.msra.mxu0 0.0
        %559 = vmatprep.subr.mxu0 0.0
        %560 = vmatpush2.msra.mxu0 0.0
        %561 = vmatprep.subr.mxu0 0.0
        %562 = vmatpush2.msra.mxu0 0.0
        %563 = vmatprep.subr.mxu0 0.0
        %564 = vmatpush2.msra.mxu0 0.0
        %565 = vmatprep.subr.mxu0 0.0
        %566 = vmatpush2.msra.mxu0 0.0
        %567 = vmatprep.mubr.f32.mxu0 0.0
        %v568 = vand.u32 %v174, 4294901760
        %569 = vmatmul.mubr.f32.gmra.mxu0 %v568
        %v570 = vpop.f32.mrf.mxu0
        %v571 = vadd.f32 %v491, %v570
        %v572 = vpop.f32.mrf.mxu0
        %573 = vdwg.mxu0
        %574 = vmatprep.subr.mxu0 0.0
        %575 = vmatpush1.msra.mxu0 0.0
        %576 = vmatprep.subr.mxu0 0.0
        %577 = vmatpush1.msra.mxu0 0.0
        %578 = vmatprep.subr.mxu0 0.0
        %579 = vmatpush1.msra.mxu0 0.0
        %580 = vmatprep.subr.mxu0 0.0
        %581 = vmatpush1.msra.mxu0 0.0
        %582 = vmatprep.subr.mxu0 0.0
        %583 = vmatpush1.msra.mxu0 0.0
        %584 = vmatprep.subr.mxu0 0.0
        %585 = vmatpush1.msra.mxu0 0.0
        %586 = vmatprep.subr.mxu0 0.0
        %587 = vmatpush1.msra.mxu0 0.0
        %588 = vmatprep.subr.mxu0 0.0
        %589 = vmatpush1.msra.mxu0 0.0
        %590 = vmatprep.subr.mxu0 0.0
        %591 = vmatpush1.msra.mxu0 0.0
        %592 = vmatprep.subr.mxu0 0.0
        %593 = vmatpush1.msra.mxu0 0.0
        %594 = vmatprep.subr.mxu0 0.0
        %595 = vmatpush1.msra.mxu0 0.0
        %596 = vmatprep.subr.mxu0 0.0
        %597 = vmatpush1.msra.mxu0 0.0
        %598 = vmatprep.subr.mxu0 0.0
        %599 = vmatpush1.msra.mxu0 0.0
        %600 = vmatprep.subr.mxu0 0.0
        %v601 = vand.u32 %v171, 4294901760
        %602 = vmatpush1.msra.mxu0 %v601
        %603 = vmatprep.subr.mxu0 0.0
        %v604 = vand.u32 %v170, 4294901760
        %605 = vmatpush1.msra.mxu0 %v604
        %606 = vmatprep.subr.mxu0 0.0
        %v607 = vand.u32 %v169, 4294901760
        %608 = vmatpush1.msra.mxu0 %v607
        %609 = vmatprep.subr.mxu0 0.0
        %610 = vmatpush2.msra.mxu0 0.0
        %611 = vmatprep.subr.mxu0 0.0
        %612 = vmatpush2.msra.mxu0 0.0
        %613 = vmatprep.subr.mxu0 0.0
        %614 = vmatpush2.msra.mxu0 0.0
        %615 = vmatprep.subr.mxu0 0.0
        %616 = vmatpush2.msra.mxu0 0.0
        %617 = vmatprep.subr.mxu0 0.0
        %618 = vmatpush2.msra.mxu0 0.0
        %619 = vmatprep.subr.mxu0 0.0
        %620 = vmatpush2.msra.mxu0 0.0
        %621 = vmatprep.subr.mxu0 0.0
        %622 = vmatpush2.msra.mxu0 0.0
        %623 = vmatprep.subr.mxu0 0.0
        %624 = vmatpush2.msra.mxu0 0.0
        %625 = vmatprep.subr.mxu0 0.0
        %626 = vmatpush2.msra.mxu0 0.0
        %627 = vmatprep.subr.mxu0 0.0
        %628 = vmatpush2.msra.mxu0 0.0
        %629 = vmatprep.subr.mxu0 0.0
        %630 = vmatpush2.msra.mxu0 0.0
        %631 = vmatprep.subr.mxu0 0.0
        %632 = vmatpush2.msra.mxu0 0.0
        %633 = vmatprep.subr.mxu0 0.0
        %634 = vmatpush2.msra.mxu0 0.0
        %635 = vmatprep.subr.mxu0 0.0
        %636 = vmatpush2.msra.mxu0 0.0
        %637 = vmatprep.subr.mxu0 0.0
        %638 = vmatpush2.msra.mxu0 0.0
        %639 = vmatprep.subr.mxu0 0.0
        %640 = vmatpush2.msra.mxu0 0.0
        %641 = vmatprep.mubr.f32.mxu0 0.0
        %v642 = vand.u32 %v174, 4294901760
        %643 = vmatmul.mubr.f32.gmra.mxu0 %v642
        %v644 = vpop.f32.mrf.mxu0
        %v645 = vadd.f32 %v571, %v644
        %v646 = vpop.f32.mrf.mxu0
        %647 = vdwg.mxu0
        %648 = vst [vmem:[%s157] sm:$0xff] %v645
        %s649 = sand.u32 %s86, 1
        %s650 = scalar_lea.sflag [#allocation4], %s649
        %s651 = sand.u32 %s86, 1
        %s652 = smul.addr %s651, 8
        %s653 = scalar_lea.vmem [#allocation5], %s652
        // Predicated region
        $region33: #{tpu_custom_call.1} parent=27 // pred_check
          %p654 = pneg %p96
        $region34: #{tpu_custom_call.1} parent=27 // pred_check_branch
          %656 = sbr.rel (%p654) target = $region36
        $region35: #{tpu_custom_call.1} parent=27 // pred_region
          %s658 = ssub.s32 128, 128
          %659 = vsyncadd %s650, %s658
          %s660 = sadd.s32 %s21, %s22
          %s661 = smul.addr %s660, 128
          %s662 = scalar_lea.hbm %s2, %s661
          %s664 = sshll.u32 %s653, 4
          %s665 = int_to_ptr.vmem [resolvable:$true] %s664
          %667 = dma.vmem_to_hbm [thread:$0]  %s665, 128, %s662, %s650
        $region36: #{tpu_custom_call.1} parent=27 // pred_fallthru
          _
      $region28: #{tpu_custom_call.1} parent=5 // pred_fallthru
        _
      %p668 = scmp.le.s32.totalorder 2, %s12
      // Predicated region
      $region37: #{tpu_custom_call.1} parent=5 // pred_check
        %p669 = pneg %p668
      $region38: #{tpu_custom_call.1} parent=5 // pred_check_branch
        %671 = sbr.rel (%p669) target = $region40
      $region39: #{tpu_custom_call.1} parent=5 // pred_region
        %s672 = ssub.s32 %s12, 2
        // Predicated region
        $region41: #{tpu_custom_call.1} parent=39 // pred_check
          %p673 = pneg %p102
        $region42: #{tpu_custom_call.1} parent=39 // pred_check_branch
          %675 = sbr.rel (%p673) target = $region44
        $region43: #{tpu_custom_call.1} parent=39 // pred_region
          %s676 = sand.u32 %s87, 1
          %s677 = scalar_lea.sflag [#allocation4], %s676
          %s678 = sand.u32 %s87, 1
          %s679 = smul.addr %s678, 8
          %s680 = scalar_lea.vmem [#allocation5], %s679
          %681 = dma.done %s677, 128
        $region44: #{tpu_custom_call.1} parent=39 // pred_fallthru
          _
      $region40: #{tpu_custom_call.1} parent=5 // pred_fallthru
        _
    $region6: #{tpu_custom_call.1} parent=1 // loop_footer
      %s16 = sadd.s32 1, %s12
    $region7: #{tpu_custom_call.1} parent=1 // loop_footer_branch
      %11 = sbr.rel target = $region3
    $region8: #{tpu_custom_call.1} parent=1 // loop_exit
      _
    %682 = vsyncpa [#allocation3], 1
    %s683 = scalar_lea.sflag [#allocation3], 1
    %684 = vsyncpa %s683, 1
    %685 = vsyncpa [#allocation4], 1
    %s686 = scalar_lea.sflag [#allocation4], 1
    %687 = vsyncpa %s686, 1

</llo_original>
